<compile_context>
chip_gen: v7x
topology: tpu7x:2x2x1
jax: 0.10.0
libtpu: 0.0.40
codegen_flags: <defaults>
</compile_context>

<pallas_src>
import functools

import jax
import jax.numpy as jnp
from jax import lax
from jax.experimental import pallas as pl
from jax.experimental.pallas import tpu as pltpu


def _tconv_kernel(x_ref, w_ref, b_ref, o_ref, xg_ref, *, kt, pad, T, N, T_out):
    """One batch element, channels-first, (time, nodes) flattened onto the lane axis.

    x_ref:  (C_in,  T*N)        input, NCHW-native with (T, N) merged
    w_ref:  (C_out, kt*C_in)    fused conv weights, w[co, k*C_in + ci] = W[co, ci, k, 0]
    b_ref:  (C_out, 1)          bias (f32)
    o_ref:  (C_out, T_out*N)    output
    xg_ref: (kt*C_in, T_out*N)  scratch: gathered (tap-shifted, zero-padded) input
    """
    c_in = x_ref.shape[0]

    # Zero the scratch once; only the small boundary strips rely on it and they are never
    # overwritten below, so the zeros persist for every subsequent grid step.
    @pl.when(pl.program_id(0) == 0)
    def _init():
        xg_ref[...] = jnp.zeros_like(xg_ref)

    # Gather the kt time-shifted slabs.  All slice bounds are static Python ints.
    for k in range(kt):
        shift = k - pad                       # temporal offset of this tap
        lo = max(0, -shift)                   # first output time step with valid input
        hi = min(T_out, T - shift)            # one past the last valid output time step
        if hi <= lo:
            continue
        xg_ref[k * c_in:(k + 1) * c_in, lo * N:hi * N] = (
            x_ref[:, (lo + shift) * N:(hi + shift) * N])

    # Single fused MXU contraction over (tap, C_in); f32 accumulation, f32 bias epilogue.
    y = lax.dot_general(
        w_ref[...], xg_ref[...],
        dimension_numbers=(((1,), (0,)), ((), ())),
        preferred_element_type=jnp.float32)   # (C_out, T_out*N)
    o_ref[...] = (y + b_ref[...]).astype(o_ref.dtype)


def temporal_convolution(x_nchw, weight, bias, kernel, *, compute_dtype=None):
    """Forward pass of TemporalConvolution (eval-mode semantics).

    Args:
      x_nchw: (B, C_in, T, N) input (PyTorch NCHW convention).
      weight: (C_out, C_in, kt, 1) Conv2d weight (PyTorch layout).
      bias:   (C_out,) Conv2d bias.
      kernel: int or (kh, kw) -> effective temporal kernel kt = kernel[1].
      compute_dtype: optional narrow dtype (e.g. jnp.bfloat16) for operands; accumulation
        stays f32 either way.
    Returns:
      (B, C_out, T_out, N) output, T_out = T + 2*((kt-1)//2) - kt + 1.
    """
    if isinstance(kernel, int):
        kernel = (1, kernel)
    kt = int(kernel[1])
    pad = (kt - 1) // 2

    B, C_in, T, N = x_nchw.shape
    C_out = weight.shape[0]
    T_out = T + 2 * pad - kt + 1
    L_in, L_out = T * N, T_out * N

    out_dtype = x_nchw.dtype
    cdt = out_dtype if compute_dtype is None else compute_dtype

    # Free reshape (no data movement): merge (T, N) so the lane dim is T*N.
    x = x_nchw.reshape(B, C_in, L_in).astype(cdt)
    # Tiny weight re-pack: (C_out, C_in, kt, 1) -> (C_out, kt*C_in), tap-major per column.
    w = jnp.transpose(weight[:, :, :, 0], (0, 2, 1)).reshape(C_out, kt * C_in).astype(cdt)
    b = bias.reshape(C_out, 1).astype(jnp.float32)

    kern = functools.partial(_tconv_kernel, kt=kt, pad=pad, T=T, N=N, T_out=T_out)

    out = pl.pallas_call(
        kern,
        out_shape=jax.ShapeDtypeStruct((B, C_out, L_out), out_dtype),
        grid=(B,),
        in_specs=[
            pl.BlockSpec((None, C_in, L_in), lambda bi: (bi, 0, 0)),
            pl.BlockSpec((C_out, kt * C_in), lambda bi: (0, 0)),   # grid-invariant
            pl.BlockSpec((C_out, 1), lambda bi: (0, 0)),           # grid-invariant
        ],
        out_specs=pl.BlockSpec((None, C_out, L_out), lambda bi: (bi, 0, 0)),
        scratch_shapes=[pltpu.VMEM((kt * C_in, L_out), cdt)],
        compiler_params=pltpu.CompilerParams(
            dimension_semantics=("parallel",)),
    )(x, w, b)

    # Free reshape back to NCHW: (B, C_out, T_out*N) -> (B, C_out, T_out, N).
    return out.reshape(B, C_out, T_out, N)


def _reference(x_nchw, weight, bias, kernel):
    """Pure-JAX reference matching torch.nn.Conv2d semantics (eval-mode dropout)."""
    if isinstance(kernel, int):
        kernel = (1, kernel)
    pad = (kernel[1] - 1) // 2
    y = lax.conv_general_dilated(
        x_nchw, weight,
        window_strides=(1, 1),
        padding=((pad, pad), (0, 0)),
        dimension_numbers=("NCHW", "OIHW", "NCHW"))
    return y + bias[None, :, None, None]


if __name__ == "__main__":
    key = jax.random.PRNGKey(0)
    k1, k2, k3 = jax.random.split(key, 3)

    # Module config: c_in=4, c_out=8, temporal kernel=3.
    B, C_in, T, N = 2, 4, 16, 16
    C_out, kernel = 8, 3

    x = jax.random.normal(k1, (B, C_in, T, N), dtype=jnp.float32)
    weight = 0.1 * jax.random.normal(k2, (C_out, C_in, kernel, 1), dtype=jnp.float32)
    bias = 0.1 * jax.random.normal(k3, (C_out,), dtype=jnp.float32)

    fn = jax.jit(functools.partial(temporal_convolution, kernel=kernel))
    out = jax.block_until_ready(fn(x, weight, bias))

    ref = _reference(x, weight, bias, kernel)
    assert out.shape == ref.shape, (out.shape, ref.shape)
    err = float(jnp.max(jnp.abs(out - ref)))
    assert err < 1e-3, err

    print("KERNEL_OK")
</pallas_src>

<mosaic_0001>
module attributes {stable_mosaic.version = 11 : i64} {
  func.func @_tconv_kernel(%arg0: i32, %arg1: memref<1x4x256xf32, #tpu.memory_space<vmem>>, %arg2: memref<8x12xf32, #tpu.memory_space<vmem>>, %arg3: memref<8x1xf32, #tpu.memory_space<vmem>>, %arg4: memref<1x8x256xf32, #tpu.memory_space<vmem>>, %arg5: memref<12x256xf32, #tpu.memory_space<vmem>>) attributes {dimension_semantics = [#tpu.dimension_semantics<parallel>], iteration_bounds = array<i64: 2>, scalar_prefetch = 0 : i64, scratch_operands = 1 : i64, tpu.core_type = #tpu.core_type<tc>, window_params = [{transform_indices = @transform_0, window_bounds = array<i64: 1, 4, 256>}, {pipeline_mode = #tpu.pipeline_mode<synchronous>, transform_indices = @transform_1, window_bounds = array<i64: 8, 12>}, {pipeline_mode = #tpu.pipeline_mode<synchronous>, transform_indices = @transform_2, window_bounds = array<i64: 8, 1>}, {transform_indices = @transform_3, window_bounds = array<i64: 1, 8, 256>}]} {
    %c0_i32 = arith.constant 0 : i32
    %0 = arith.cmpi eq, %arg0, %c0_i32 : i32
    %1 = arith.extui %0 : i1 to i32
    %c0_i32_0 = arith.constant 0 : i32
    %2 = arith.cmpi ne, %1, %c0_i32_0 : i32
    scf.if %2 {
      %cst_21 = arith.constant 0.000000e+00 : f32
      %21 = vector.broadcast %cst_21 : f32 to vector<12x256xf32>
      %c0_22 = arith.constant 0 : index
      %c0_23 = arith.constant 0 : index
      %22 = vector.load %arg5[%c0_22, %c0_23] : memref<12x256xf32, #tpu.memory_space<vmem>>, vector<12x256xf32>
      tpu.vector_store %arg5[%c0_22, %c0_23], %21 {strides = array<i32>} : memref<12x256xf32, #tpu.memory_space<vmem>>, vector<12x256xf32>,
    } else {
    }
    %c0 = arith.constant 0 : index
    %c0_1 = arith.constant 0 : index
    %c0_2 = arith.constant 0 : index
    %3 = vector.load %arg1[%c0, %c0_1, %c0_2] : memref<1x4x256xf32, #tpu.memory_space<vmem>>, vector<1x4x240xf32>
    %4 = vector.shape_cast %3 : vector<1x4x240xf32> to vector<4x240xf32>
    %c0_3 = arith.constant 0 : index
    %c16 = arith.constant 16 : index
    %5 = vector.load %arg5[%c0_3, %c16] : memref<12x256xf32, #tpu.memory_space<vmem>>, vector<4x240xf32>
    tpu.vector_store %arg5[%c0_3, %c16], %4 {strides = array<i32>} : memref<12x256xf32, #tpu.memory_space<vmem>>, vector<4x240xf32>,
    %c0_4 = arith.constant 0 : index
    %c0_5 = arith.constant 0 : index
    %c0_6 = arith.constant 0 : index
    %6 = vector.load %arg1[%c0_4, %c0_5, %c0_6] : memref<1x4x256xf32, #tpu.memory_space<vmem>>, vector<1x4x256xf32>
    %7 = vector.shape_cast %6 : vector<1x4x256xf32> to vector<4x256xf32>
    %c4 = arith.constant 4 : index
    %c0_7 = arith.constant 0 : index
    %8 = vector.load %arg5[%c4, %c0_7] : memref<12x256xf32, #tpu.memory_space<vmem>>, vector<4x256xf32>
    tpu.vector_store %arg5[%c4, %c0_7], %7 {strides = array<i32>} : memref<12x256xf32, #tpu.memory_space<vmem>>, vector<4x256xf32>,
    %c0_8 = arith.constant 0 : index
    %c0_9 = arith.constant 0 : index
    %c16_10 = arith.constant 16 : index
    %9 = vector.load %arg1[%c0_8, %c0_9, %c16_10] : memref<1x4x256xf32, #tpu.memory_space<vmem>>, vector<1x4x240xf32>
    %10 = vector.shape_cast %9 : vector<1x4x240xf32> to vector<4x240xf32>
    %c8 = arith.constant 8 : index
    %c0_11 = arith.constant 0 : index
    %11 = vector.load %arg5[%c8, %c0_11] : memref<12x256xf32, #tpu.memory_space<vmem>>, vector<4x240xf32>
    tpu.vector_store %arg5[%c8, %c0_11], %10 {strides = array<i32>} : memref<12x256xf32, #tpu.memory_space<vmem>>, vector<4x240xf32>,
    %c0_12 = arith.constant 0 : index
    %c0_13 = arith.constant 0 : index
    %12 = vector.load %arg2[%c0_12, %c0_13] : memref<8x12xf32, #tpu.memory_space<vmem>>, vector<8x12xf32>
    %c0_14 = arith.constant 0 : index
    %c0_15 = arith.constant 0 : index
    %13 = vector.load %arg5[%c0_14, %c0_15] : memref<12x256xf32, #tpu.memory_space<vmem>>, vector<12x256xf32>
    %cst = arith.constant dense<0.000000e+00> : vector<8x256xf32>
    %14 = tpu.matmul %12, %13, %cst {dimension_numbers = #tpu.dot_dimension_numbers<[1], [0], [0], [1], [0, 0, 1, 1], [], []>} : vector<8x12xf32>, vector<12x256xf32>, vector<8x256xf32> -> vector<8x256xf32>
    %c0_16 = arith.constant 0 : index
    %c0_17 = arith.constant 0 : index
    %15 = vector.load %arg3[%c0_16, %c0_17] : memref<8x1xf32, #tpu.memory_space<vmem>>, vector<8x1xf32>
    %16 = vector.broadcast %15 : vector<8x1xf32> to vector<8x256xf32>
    %17 = arith.addf %14, %16 : vector<8x256xf32>
    %c0_18 = arith.constant 0 : index
    %c0_19 = arith.constant 0 : index
    %c0_20 = arith.constant 0 : index
    %18 = vector.load %arg4[%c0_18, %c0_19, %c0_20] : memref<1x8x256xf32, #tpu.memory_space<vmem>>, vector<1x8x256xf32>
    %19 = vector.shape_cast %18 : vector<1x8x256xf32> to vector<8x256xf32>
    %20 = vector.shape_cast %17 : vector<8x256xf32> to vector<1x8x256xf32>
    tpu.vector_store %arg4[%c0_18, %c0_19, %c0_20], %20 {strides = array<i32>} : memref<1x8x256xf32, #tpu.memory_space<vmem>>, vector<1x8x256xf32>,
    return
  }
  func.func @transform_0(%arg0: i32) -> (i32, i32, i32) {
    %c0_i32 = arith.constant 0 : i32
    %c0_i32_0 = arith.constant 0 : i32
    %c0_i32_1 = arith.constant 0 : i32
    return %arg0, %c0_i32, %c0_i32_0 : i32, i32, i32
  }
  func.func @transform_1(%arg0: i32) -> (i32, i32) {
    %c0_i32 = arith.constant 0 : i32
    %c0_i32_0 = arith.constant 0 : i32
    %c0_i32_1 = arith.constant 0 : i32
    return %c0_i32, %c0_i32_0 : i32, i32
  }
  func.func @transform_2(%arg0: i32) -> (i32, i32) {
    %c0_i32 = arith.constant 0 : i32
    %c0_i32_0 = arith.constant 0 : i32
    %c0_i32_1 = arith.constant 0 : i32
    return %c0_i32, %c0_i32_0 : i32, i32
  }
  func.func @transform_3(%arg0: i32) -> (i32, i32, i32) {
    %c0_i32 = arith.constant 0 : i32
    %c0_i32_0 = arith.constant 0 : i32
    %c0_i32_1 = arith.constant 0 : i32
    return %arg0, %c0_i32, %c0_i32_0 : i32, i32, i32
  }
}

</mosaic_0001>

<llo_original>
// kernel: temporal_convolution.1
$region0: #{temporal_convolution.1}
  #allocation0 [shape = 'u32[]', space=smem, size = 0x4, offset = 0x4, fixed_abs, tag = 'smem constant byte address 0x4 - core index']
  #allocation1 [shape = 'u32[144,128]{1,0:T(1,128)}', space=vmem, size = 0x12000, scoped, tag = 'internal scratch']
  #allocation2 [shape = 'f32[12,256]{1,0:T(8,128)}', space=vmem, size = 0x4000, scoped, tag = 'scratch operand']
  %s0 = inlined_call_operand.vmem [shape: f32[2,4,256], index: 0, kind: input, shape index: {}]
  %s1 = inlined_call_operand.vmem [shape: f32[8,12], index: 1, kind: input, shape index: {}]
  %s2 = inlined_call_operand.vmem [shape: f32[8,1], index: 2, kind: input, shape index: {}]
  %s3 = inlined_call_operand.vmem [shape: f32[2,8,256], index: 3, kind: output, shape index: {}]
  %s4 = sld [smem:[#allocation0]]
  $region49: #{temporal_convolution.1} parent=0
    _
  %s6 = ssub.s32 1, %s4
  %s7 = scalar_select 0, %s6, %s4
  loop: start=0, step=1, limit=4
  $region2: #{temporal_convolution.1} parent=0 // loop_pre_header
    _
  $region3: #{temporal_convolution.1} parent=0 // loop_header
    %s9 = sphi 0, %s13
    %p10 = scmp.ge.s32.totalorder %s9, 4
    %s19 = sphi 0, %s21
    %s22 = sphi 0, %s19
    %s23 = sphi 0, %s22
    %s39 = sphi 0, %s23
    %s43 = sphi 0, %s43
    %s45 = sphi 0, %s43
    %s46 = sphi 0, %s45
    %s60 = sphi 0, %s46
    %s64 = sphi 0, %s64
    %s66 = sphi 0, %s64
    %s67 = sphi 0, %s66
    %s81 = sphi 0, %s67
    %s87 = sphi 0, %s89
    %s90 = sphi 0, %s87
    %s91 = sphi 0, %s90
    %s107 = sphi 0, %s91
  $region4: #{temporal_convolution.1} parent=0 // loop_header_branch
    %12 = sbr.rel (%p10) target = $region8
  $region5: #{temporal_convolution.1} parent=0 // loop_body
    %s14 = ssub.s32 %s9, 1
    %s15 = ssub.s32 %s9, 2
    %s16 = sadd.s32 %s9, 1
    %s17 = ssub.s32 %s9, %s16
    %p18 = scmp.eq.s32.totalorder %s17, 0
    %s20 = sadd.s32 %s19, 1
    %s21 = scalar_select %p18, %s19, %s20
    %p24 = pneg %p18
    %p25 = scmp.eq.s32.totalorder %s9, 1
    %p26 = por %p24, %p25
    %p27 = scmp.ne.s32.totalorder %s19, %s22
    %p28 = scmp.eq.s32.totalorder %s9, 0
    %p29 = por %p27, %p28
    %p30 = scmp.ne.s32.totalorder %s19, %s22
    %p31 = scmp.eq.s32.totalorder %s14, 1
    %p32 = por %p30, %p31
    %p33 = scmp.ne.s32.totalorder %s22, %s23
    %p34 = scmp.eq.s32.totalorder %s14, 0
    %p35 = por %p33, %p34
    %p36 = scmp.ne.s32.totalorder %s22, %s23
    %p37 = scmp.eq.s32.totalorder %s15, 1
    %p38 = por %p36, %p37
    %p40 = scmp.ne.s32.totalorder %s23, %s39
    %p41 = scmp.eq.s32.totalorder %s15, 0
    %p42 = por %p40, %p41
    %s44 = sadd.s32 %s43, 1
    %p47 = scmp.eq.s32.totalorder %s9, 1
    %p48 = scmp.ne.s32.totalorder %s43, %s45
    %p49 = scmp.eq.s32.totalorder %s9, 0
    %p50 = por %p48, %p49
    %p51 = scmp.ne.s32.totalorder %s43, %s45
    %p52 = scmp.eq.s32.totalorder %s14, 1
    %p53 = por %p51, %p52
    %p54 = scmp.ne.s32.totalorder %s45, %s46
    %p55 = scmp.eq.s32.totalorder %s14, 0
    %p56 = por %p54, %p55
    %p57 = scmp.ne.s32.totalorder %s45, %s46
    %p58 = scmp.eq.s32.totalorder %s15, 1
    %p59 = por %p57, %p58
    %p61 = scmp.ne.s32.totalorder %s46, %s60
    %p62 = scmp.eq.s32.totalorder %s15, 0
    %p63 = por %p61, %p62
    %s65 = sadd.s32 %s64, 1
    %p68 = scmp.eq.s32.totalorder %s9, 1
    %p69 = scmp.ne.s32.totalorder %s64, %s66
    %p70 = scmp.eq.s32.totalorder %s9, 0
    %p71 = por %p69, %p70
    %p72 = scmp.ne.s32.totalorder %s64, %s66
    %p73 = scmp.eq.s32.totalorder %s14, 1
    %p74 = por %p72, %p73
    %p75 = scmp.ne.s32.totalorder %s66, %s67
    %p76 = scmp.eq.s32.totalorder %s14, 0
    %p77 = por %p75, %p76
    %p78 = scmp.ne.s32.totalorder %s66, %s67
    %p79 = scmp.eq.s32.totalorder %s15, 1
    %p80 = por %p78, %p79
    %p82 = scmp.ne.s32.totalorder %s67, %s81
    %p83 = scmp.eq.s32.totalorder %s15, 0
    %p84 = por %p82, %p83
    %s85 = ssub.s32 %s9, %s16
    %p86 = scmp.eq.s32.totalorder %s85, 0
    %s88 = sadd.s32 %s87, 1
    %s89 = scalar_select %p86, %s87, %s88
    %p92 = pneg %p86
    %p93 = scmp.eq.s32.totalorder %s9, 1
    %p94 = por %p92, %p93
    %p95 = scmp.ne.s32.totalorder %s87, %s90
    %p96 = scmp.eq.s32.totalorder %s9, 0
    %p97 = por %p95, %p96
    %p98 = scmp.ne.s32.totalorder %s87, %s90
    %p99 = scmp.eq.s32.totalorder %s14, 1
    %p100 = por %p98, %p99
    %p101 = scmp.ne.s32.totalorder %s90, %s91
    %p102 = scmp.eq.s32.totalorder %s14, 0
    %p103 = por %p101, %p102
    %p104 = scmp.ne.s32.totalorder %s90, %s91
    %p105 = scmp.eq.s32.totalorder %s15, 1
    %p106 = por %p104, %p105
    %p108 = scmp.ne.s32.totalorder %s91, %s107
    %p109 = scmp.eq.s32.totalorder %s15, 0
    %p110 = por %p108, %p109
    %p111 = scmp.le.s32.totalorder 1, %s9
    %p112 = scmp.lt.s32.totalorder %s9, 3
    %p113 = pnand %p111, %p112
    %p114 = pneg %p113
    // Predicated region
    $region9: #{temporal_convolution.1} parent=5 // pred_check
      _
    $region10: #{temporal_convolution.1} parent=5 // pred_check_branch
      %116 = sbr.rel (%p113) target = $region12
    $region11: #{temporal_convolution.1} parent=5 // pred_region
      %s117 = ssub.s32 %s9, 1
      // Predicated region
      $region13: #{temporal_convolution.1} parent=11 // pred_check
        %p118 = pneg %p56
      $region14: #{temporal_convolution.1} parent=11 // pred_check_branch
        %120 = sbr.rel (%p118) target = $region16
      $region15: #{temporal_convolution.1} parent=11 // pred_region
        _
      $region16: #{temporal_convolution.1} parent=11 // pred_fallthru
        _
      // Predicated region
      $region17: #{temporal_convolution.1} parent=11 // pred_check
        %p121 = pneg %p77
      $region18: #{temporal_convolution.1} parent=11 // pred_check_branch
        %123 = sbr.rel (%p121) target = $region20
      $region19: #{temporal_convolution.1} parent=11 // pred_region
        _
      $region20: #{temporal_convolution.1} parent=11 // pred_fallthru
        _
    $region12: #{temporal_convolution.1} parent=5 // pred_fallthru
      _
    %p124 = scmp.lt.s32.totalorder %s9, 2
    // Predicated region
    $region21: #{temporal_convolution.1} parent=5 // pred_check
      %p125 = pneg %p124
    $region22: #{temporal_convolution.1} parent=5 // pred_check_branch
      %127 = sbr.rel (%p125) target = $region24
    $region23: #{temporal_convolution.1} parent=5 // pred_region
      // Predicated region
      $region25: #{temporal_convolution.1} parent=23 // pred_check
        %p128 = pneg %p29
      $region26: #{temporal_convolution.1} parent=23 // pred_check_branch
        %130 = sbr.rel (%p128) target = $region28
      $region27: #{temporal_convolution.1} parent=23 // pred_region
        %p131 = scmp.lt.s32.totalorder %s9, 1
        %s132 = scalar_select %p131, %s9, 1
        %s133 = smul.addr %s132, 2
        %s134 = smul.addr %s133, 4
        %s135 = scalar_lea.vmem %s0, %s134
      $region28: #{temporal_convolution.1} parent=23 // pred_fallthru
        _
    $region24: #{temporal_convolution.1} parent=5 // pred_fallthru
      _
    %p136 = scmp.le.s32.totalorder 1, %s9
    %p137 = scmp.lt.s32.totalorder %s9, 3
    %p138 = pnand %p136, %p137
    %p139 = pneg %p138
    // Predicated region
    $region29: #{temporal_convolution.1} parent=5 // pred_check
      _
    $region30: #{temporal_convolution.1} parent=5 // pred_check_branch
      %141 = sbr.rel (%p138) target = $region32
    $region31: #{temporal_convolution.1} parent=5 // pred_region
      %s142 = ssub.s32 %s9, 1
      %p143 = scmp.lt.s32.totalorder %s14, 1
      %s144 = scalar_select %p143, %s14, 1
      %s145 = smul.addr %s144, 2
      %s146 = smul.addr %s145, 4
      %s147 = scalar_lea.vmem %s0, %s146
      %p148 = pneg %p35
      %p149 = pneg %p32
      %p150 = pneg %p56
      %p151 = pneg %p53
      %p152 = pneg %p77
      %p153 = pneg %p74
      %p154 = pneg %p103
      %p155 = pneg %p100
      %p156 = scmp.lt.s32.totalorder %s14, 1
      %s157 = scalar_select %p156, %s14, 1
      %s158 = smul.addr %s157, 2
      %s159 = smul.addr %s158, 8
      %s160 = scalar_lea.vmem %s3, %s159
      %p161 = scmp.lt.s32.totalorder %s14, 1
      %s162 = scalar_select %p161, %s14, 1
      %s163 = smul.addr %s162, 2
      %s164 = smul.addr %s163, 4
      %s165 = scalar_lea.vmem %s0, %s164
      %p166 = scmp.lt.s32.totalorder %s14, 1
      %s167 = scalar_select %p166, %s14, 1
      %s168 = smul.addr %s167, 2
      %s169 = smul.addr %s168, 8
      %s170 = scalar_lea.vmem %s3, %s169
      %p171 = scmp.eq.s32.totalorder %s14, 0
      // Predicated region
      $region33: #{temporal_convolution.1} parent=31 // pred_check
        %p172 = pneg %p171
      $region34: #{temporal_convolution.1} parent=31 // pred_check_branch
        %174 = sbr.rel (%p172) target = $region36
      $region35: #{temporal_convolution.1} parent=31 // pred_region
        %175 = vst [vmem:[#allocation2] sm:$0xff] 0.0
        %176 = vst [vmem:[#allocation2 + $0x8] sm:$0xff] 0.0
        %177 = vst [vmem:[#allocation2 + $0x10] sm:$0xf] 0.0
        %178 = vst [vmem:[#allocation2 + $0x18] sm:$0xf] 0.0
      $region36: #{temporal_convolution.1} parent=31 // pred_fallthru
        _
      %v179 = vld [vmem:[%s165] sm:$0xff]
      %v181 = vcombine.high %v179, %v179
      %182 = vrot.lane.b32.xlu0 %v179, 16
      %v183 = vpop.permute.xlu0 %182
      %184 = vrot.lane.b32.xlu0 %v181, 16
      %v185 = vpop.permute.xlu0 %184
      %vm186 = vcmask 130048
      %v187 = vsel %vm186, %v183, %v185
      %vm190 = vcmask 1043584
      %191 = vst.msk [vmem:[#allocation2] sm:$0xf] %vm190, %v183
      %192 = vst [vmem:[#allocation2 + $0x8] sm:$0xf] %v187
      %v193 = vld [vmem:[%s165] sm:$0xff]
      %v195 = vcombine.low %v193, %v193
      %197 = vst [vmem:[#allocation2] sm:$0xf0] %v195
      %198 = vst [vmem:[#allocation2 + $0x8] sm:$0xf0] %v193
      %v199 = vld [vmem:[%s165] sm:$0xff]
      %v201 = vcombine.high %v199, %v199
      %202 = vrot.lane.b32.xlu0 %v199, 112
      %v203 = vpop.permute.xlu0 %202
      %204 = vrot.lane.b32.xlu0 %v201, 112
      %v205 = vpop.permute.xlu0 %204
      %vm206 = vcmask 916480
      %v207 = vsel %vm206, %v203, %v205
      %210 = vst [vmem:[#allocation2 + $0x10] sm:$0xf] %v207
      %vm211 = vcmask 912384
      %212 = vst.msk [vmem:[#allocation2 + $0x18] sm:$0xf] %vm211, %v205
      %v213 = vld [vmem:[%s1] sm:$0xff]
      %v214 = vld [vmem:[#allocation2] sm:$0xff]
      %v215 = vld [vmem:[#allocation2 + $0x8] sm:$0xff]
      %v216 = vld [vmem:[#allocation2 + $0x10] sm:$0xf]
      %v217 = vld [vmem:[#allocation2 + $0x18] sm:$0xf]
      %v218 = vld [vmem:[%s2] sm:$0xff]
      %220 = vset.pattern.permute.xlu0 0
      %221 = vperm.xlu0 %220, %v218
      %v222 = vpop.permute.xlu0 %221
      %vm224 = vcmask 97280
      %v226 = vsel %vm224, %v213, 0
      %vm228 = vcmask 1043456
      %v230 = vsel %vm228, %v216, 0
      %v233 = vsel %vm228, %v217, 0
      %235 = vmatprep.subr.mxu0 %v215
      %236 = vmatpush1.msra.mxu0 %v214
      %237 = vmatprep.subr.mxu0 %v233
      %238 = vmatpush1.msra.mxu0 %v230
      %239 = vmatprep.subr.mxu0 0.0
      %240 = vmatpush1.msra.mxu0 0.0
      %241 = vmatprep.subr.mxu0 0.0
      %242 = vmatpush1.msra.mxu0 0.0
      %243 = vmatprep.subr.mxu0 0.0
      %244 = vmatpush1.msra.mxu0 0.0
      %245 = vmatprep.subr.mxu0 0.0
      %246 = vmatpush1.msra.mxu0 0.0
      %247 = vmatprep.subr.mxu0 0.0
      %248 = vmatpush1.msra.mxu0 0.0
      %249 = vmatprep.subr.mxu0 0.0
      %250 = vmatpush1.msra.mxu0 0.0
      %251 = vmatprep.subr.mxu0 0.0
      %252 = vmatpush1.msra.mxu0 0.0
      %253 = vmatprep.subr.mxu0 0.0
      %254 = vmatpush1.msra.mxu0 0.0
      %255 = vmatprep.subr.mxu0 0.0
      %256 = vmatpush1.msra.mxu0 0.0
      %257 = vmatprep.subr.mxu0 0.0
      %258 = vmatpush1.msra.mxu0 0.0
      %259 = vmatprep.subr.mxu0 0.0
      %260 = vmatpush1.msra.mxu0 0.0
      %261 = vmatprep.subr.mxu0 0.0
      %262 = vmatpush1.msra.mxu0 0.0
      %263 = vmatprep.subr.mxu0 0.0
      %264 = vmatpush1.msra.mxu0 0.0
      %265 = vmatprep.subr.mxu0 0.0
      %266 = vmatpush1.msra.mxu0 0.0
      %267 = vmatprep.subr.mxu0 0.0
      %268 = vmatpush1.msra.mxu0 0.0
      %269 = vmatprep.subr.mxu0 0.0
      %270 = vmatpush1.msra.mxu0 0.0
      %271 = vmatprep.subr.mxu0 0.0
      %272 = vmatpush1.msra.mxu0 0.0
      %273 = vmatprep.subr.mxu0 0.0
      %274 = vmatpush1.msra.mxu0 0.0
      %275 = vmatprep.subr.mxu0 0.0
      %276 = vmatpush1.msra.mxu0 0.0
      %277 = vmatprep.subr.mxu0 0.0
      %278 = vmatpush1.msra.mxu0 0.0
      %279 = vmatprep.subr.mxu0 0.0
      %280 = vmatpush1.msra.mxu0 0.0
      %281 = vmatprep.subr.mxu0 0.0
      %282 = vmatpush1.msra.mxu0 0.0
      %283 = vmatprep.subr.mxu0 0.0
      %284 = vmatpush1.msra.mxu0 0.0
      %285 = vmatprep.subr.mxu0 0.0
      %286 = vmatpush1.msra.mxu0 0.0
      %287 = vmatprep.subr.mxu0 0.0
      %288 = vmatpush1.msra.mxu0 0.0
      %289 = vmatprep.subr.mxu0 0.0
      %290 = vmatpush1.msra.mxu0 0.0
      %291 = vmatprep.subr.mxu0 0.0
      %292 = vmatpush1.msra.mxu0 0.0
      %293 = vmatprep.subr.mxu0 0.0
      %294 = vmatpush1.msra.mxu0 0.0
      %295 = vmatprep.subr.mxu0 0.0
      %296 = vmatpush1.msra.mxu0 0.0
      %297 = vmatprep.subr.mxu0 0.0
      %298 = vmatpush1.msra.mxu0 0.0
      %299 = vmatprep.mubr.f32.mxu0 0.0
      %300 = vmatmul.mubr.f32.gmra.mrb[0].mxu0 %v226
      %v301 = vpop.f32.mrb[0].mxu0
      %v302 = vadd.f32 %v222, %v301
      %v303 = vpop.f32.mrb[0].mxu0
      %v304 = vadd.f32 %v222, %v303
      %305 = vdwg.mxu0
      %306 = vst [vmem:[%s170] sm:$0xff] %v302
      %307 = vst [vmem:[%s170 + $0x8] sm:$0xff] %v304
      %p308 = scmp.lt.s32.totalorder %s14, 1
      %s309 = scalar_select %p308, %s14, 1
      %s310 = smul.addr %s309, 2
      %s311 = smul.addr %s310, 8
      %s312 = scalar_lea.vmem %s3, %s311
      // Predicated region
      $region37: #{temporal_convolution.1} parent=31 // pred_check
        %p313 = pneg %p100
      $region38: #{temporal_convolution.1} parent=31 // pred_check_branch
        %315 = sbr.rel (%p313) target = $region40
      $region39: #{temporal_convolution.1} parent=31 // pred_region
        _
      $region40: #{temporal_convolution.1} parent=31 // pred_fallthru
        _
    $region32: #{temporal_convolution.1} parent=5 // pred_fallthru
      _
    %p316 = scmp.le.s32.totalorder 2, %s9
    // Predicated region
    $region41: #{temporal_convolution.1} parent=5 // pred_check
      %p317 = pneg %p316
    $region42: #{temporal_convolution.1} parent=5 // pred_check_branch
      %319 = sbr.rel (%p317) target = $region44
    $region43: #{temporal_convolution.1} parent=5 // pred_region
      %s320 = ssub.s32 %s9, 2
      // Predicated region
      $region45: #{temporal_convolution.1} parent=43 // pred_check
        %p321 = pneg %p106
      $region46: #{temporal_convolution.1} parent=43 // pred_check_branch
        %323 = sbr.rel (%p321) target = $region48
      $region47: #{temporal_convolution.1} parent=43 // pred_region
        %p324 = scmp.lt.s32.totalorder %s15, 1
        %s325 = scalar_select %p324, %s15, 1
        %s326 = smul.addr %s325, 2
        %s327 = smul.addr %s326, 8
        %s328 = scalar_lea.vmem %s3, %s327
      $region48: #{temporal_convolution.1} parent=43 // pred_fallthru
        _
    $region44: #{temporal_convolution.1} parent=5 // pred_fallthru
      _
  $region6: #{temporal_convolution.1} parent=0 // loop_footer
    %s13 = sadd.s32 1, %s9
  $region7: #{temporal_convolution.1} parent=0 // loop_footer_branch
    %8 = sbr.rel target = $region3
  $region8: #{temporal_convolution.1} parent=0 // loop_exit
    _

</llo_original>
